<compile_context>
chip_gen: v5e
topology: v5e:2x2
jax: 0.10.0
libtpu: 0.0.40
codegen_flags: <defaults>
</compile_context>

<pallas_src>
import functools

import jax
import jax.numpy as jnp
from jax.experimental import pallas as pl
from jax.experimental.pallas import tpu as pltpu

LANES = 128          # TPU lane width; all feature dims are zero-padded to this
W_ROWS = LANES       # rows occupied by each padded weight block in the slab
B_ROWS = 8           # rows reserved per bias (sublane alignment); bias in row 0
SLAB_ROWS = 3 * (W_ROWS + B_ROWS)   # 408 rows total (multiple of 8)

# Static row offsets of each parameter inside the packed slab.
_W1_OFF = 0
_B1_OFF = _W1_OFF + W_ROWS
_W2_OFF = _B1_OFF + B_ROWS
_B2_OFF = _W2_OFF + W_ROWS
_W3_OFF = _B2_OFF + B_ROWS
_B3_OFF = _W3_OFF + W_ROWS


def dqn_kernel(x_ref, slab_ref, o_ref):
    # One fused block per batch tile: three MXU matmuls + VPU ReLUs.
    x = x_ref[...]                                   # [tb, 128]
    w1 = slab_ref[pl.ds(_W1_OFF, W_ROWS), :]         # [128, 128]
    b1 = slab_ref[pl.ds(_B1_OFF, 1), :]              # [1, 128]
    w2 = slab_ref[pl.ds(_W2_OFF, W_ROWS), :]
    b2 = slab_ref[pl.ds(_B2_OFF, 1), :]
    w3 = slab_ref[pl.ds(_W3_OFF, W_ROWS), :]
    b3 = slab_ref[pl.ds(_B3_OFF, 1), :]

    h1 = jnp.maximum(jnp.dot(x, w1, preferred_element_type=jnp.float32) + b1, 0.0)
    h2 = jnp.maximum(jnp.dot(h1, w2, preferred_element_type=jnp.float32) + b2, 0.0)
    q = jnp.dot(h2, w3, preferred_element_type=jnp.float32) + b3
    o_ref[...] = q.astype(o_ref.dtype)               # lane-dense [tb, 128] store


def pack_params(params):
    """Pack (w1,b1,w2,b2,w3,b3) ([in,out] weights) into one [408,128] f32 slab."""
    w1, b1, w2, b2, w3, b3 = params

    def pad_w(w):
        out = jnp.zeros((W_ROWS, LANES), jnp.float32)
        return out.at[: w.shape[0], : w.shape[1]].set(w.astype(jnp.float32))

    def pad_b(b):
        out = jnp.zeros((B_ROWS, LANES), jnp.float32)
        return out.at[0, : b.size].set(b.reshape(-1).astype(jnp.float32))

    return jnp.concatenate(
        [pad_w(w1), pad_b(b1), pad_w(w2), pad_b(b2), pad_w(w3), pad_b(b3)],
        axis=0,
    )


@functools.partial(jax.jit, static_argnames=("out_features", "block_batch"))
def dqn_forward(x, slab, *, out_features, block_batch=128):
    batch, in_features = x.shape
    # Batch tile: 128 rows when the batch is large, else the 8-aligned batch.
    tb = min(block_batch, max(8, -(-batch // 8) * 8))
    batch_p = -(-batch // tb) * tb

    # Zero-pad features to 128 lanes and batch to a multiple of the tile.
    x_p = jnp.zeros((batch_p, LANES), jnp.float32).at[:batch, :in_features].set(x)

    out_p = pl.pallas_call(
        dqn_kernel,
        out_shape=jax.ShapeDtypeStruct((batch_p, LANES), jnp.float32),
        grid=(batch_p // tb,),
        in_specs=[
            pl.BlockSpec((tb, LANES), lambda i: (i, 0)),          # batch tile
            pl.BlockSpec((SLAB_ROWS, LANES), lambda i: (0, 0)),   # weights resident
        ],
        out_specs=pl.BlockSpec((tb, LANES), lambda i: (i, 0)),
        compiler_params=pltpu.CompilerParams(
            dimension_semantics=("parallel",),   # v7x: shard batch over 2 TCs
        ),
    )(x_p, slab)

    # Slice off lane/batch padding -> real Q-values.
    return out_p[:batch, :out_features]


def init_linear_params(key, in_features, out_features):
    # PyTorch nn.Linear default init: U(-1/sqrt(fan_in), 1/sqrt(fan_in))
    kw, kb = jax.random.split(key)
    bound = 1.0 / jnp.sqrt(jnp.float32(in_features))
    # stored as [in, out] (transpose of PyTorch's [out, in])
    w = jax.random.uniform(kw, (in_features, out_features), jnp.float32,
                           minval=-bound, maxval=bound)
    b = jax.random.uniform(kb, (1, out_features), jnp.float32,
                           minval=-bound, maxval=bound)
    return w, b


if __name__ == "__main__":
    # Cart-pole DQN sizes: 4 observations -> hidden 32 -> hidden 32 -> 2 actions
    input_size, hidden1_size, hidden2_size, output_size = 4, 32, 32, 2
    batch = 200  # exercises batch padding + a 2-step grid (2 x 128-row tiles)

    key = jax.random.PRNGKey(0)
    k_x, k1, k2, k3 = jax.random.split(key, 4)

    x = jax.random.normal(k_x, (batch, input_size), jnp.float32)
    w1, b1 = init_linear_params(k1, input_size, hidden1_size)
    w2, b2 = init_linear_params(k2, hidden1_size, hidden2_size)
    w3, b3 = init_linear_params(k3, hidden2_size, output_size)
    params = (w1, b1, w2, b2, w3, b3)

    slab = pack_params(params)
    out = dqn_forward(x, slab, out_features=output_size)
    jax.block_until_ready(out)

    # Pure-JAX reference check
    ref = jnp.maximum(x @ w1 + b1, 0.0)
    ref = jnp.maximum(ref @ w2 + b2, 0.0)
    ref = ref @ w3 + b3
    assert out.shape == (batch, output_size)
    assert jnp.allclose(out, ref, atol=1e-5, rtol=1e-5)

    print("KERNEL_OK")
</pallas_src>

<mosaic_0001>
module attributes {stable_mosaic.version = 11 : i64} {
  func.func @dqn_kernel(%arg0: i32, %arg1: memref<128x128xf32, #tpu.memory_space<vmem>>, %arg2: memref<408x128xf32, #tpu.memory_space<vmem>>, %arg3: memref<128x128xf32, #tpu.memory_space<vmem>>) attributes {dimension_semantics = [#tpu.dimension_semantics<parallel>], iteration_bounds = array<i64: 2>, scalar_prefetch = 0 : i64, scratch_operands = 0 : i64, tpu.core_type = #tpu.core_type<tc>, window_params = [{transform_indices = @transform_0, window_bounds = array<i64: 128, 128>}, {pipeline_mode = #tpu.pipeline_mode<synchronous>, transform_indices = @transform_1, window_bounds = array<i64: 408, 128>}, {transform_indices = @transform_2, window_bounds = array<i64: 128, 128>}]} {
    %c0 = arith.constant 0 : index
    %c0_0 = arith.constant 0 : index
    %0 = vector.load %arg1[%c0, %c0_0] : memref<128x128xf32, #tpu.memory_space<vmem>>, vector<128x128xf32>
    %c0_1 = arith.constant 0 : index
    %c0_2 = arith.constant 0 : index
    %1 = vector.load %arg2[%c0_1, %c0_2] : memref<408x128xf32, #tpu.memory_space<vmem>>, vector<128x128xf32>
    %c128 = arith.constant 128 : index
    %c0_3 = arith.constant 0 : index
    %2 = vector.load %arg2[%c128, %c0_3] : memref<408x128xf32, #tpu.memory_space<vmem>>, vector<1x128xf32>
    %c136 = arith.constant 136 : index
    %c0_4 = arith.constant 0 : index
    %3 = vector.load %arg2[%c136, %c0_4] : memref<408x128xf32, #tpu.memory_space<vmem>>, vector<128x128xf32>
    %c264 = arith.constant 264 : index
    %c0_5 = arith.constant 0 : index
    %4 = vector.load %arg2[%c264, %c0_5] : memref<408x128xf32, #tpu.memory_space<vmem>>, vector<1x128xf32>
    %c272 = arith.constant 272 : index
    %c0_6 = arith.constant 0 : index
    %5 = vector.load %arg2[%c272, %c0_6] : memref<408x128xf32, #tpu.memory_space<vmem>>, vector<128x128xf32>
    %c400 = arith.constant 400 : index
    %c0_7 = arith.constant 0 : index
    %6 = vector.load %arg2[%c400, %c0_7] : memref<408x128xf32, #tpu.memory_space<vmem>>, vector<1x128xf32>
    %cst = arith.constant dense<0.000000e+00> : vector<128x128xf32>
    %7 = tpu.matmul %0, %1, %cst {dimension_numbers = #tpu.dot_dimension_numbers<[1], [0], [0], [1], [0, 0, 1, 1], [], []>} : vector<128x128xf32>, vector<128x128xf32>, vector<128x128xf32> -> vector<128x128xf32>
    %8 = vector.broadcast %2 : vector<1x128xf32> to vector<128x128xf32>
    %9 = arith.addf %7, %8 : vector<128x128xf32>
    %cst_8 = arith.constant 0.000000e+00 : f32
    %10 = vector.broadcast %cst_8 : f32 to vector<128x128xf32>
    %11 = arith.maximumf %9, %10 : vector<128x128xf32>
    %cst_9 = arith.constant dense<0.000000e+00> : vector<128x128xf32>
    %12 = tpu.matmul %11, %3, %cst_9 {dimension_numbers = #tpu.dot_dimension_numbers<[1], [0], [0], [1], [0, 0, 1, 1], [], []>} : vector<128x128xf32>, vector<128x128xf32>, vector<128x128xf32> -> vector<128x128xf32>
    %13 = vector.broadcast %4 : vector<1x128xf32> to vector<128x128xf32>
    %14 = arith.addf %12, %13 : vector<128x128xf32>
    %cst_10 = arith.constant 0.000000e+00 : f32
    %15 = vector.broadcast %cst_10 : f32 to vector<128x128xf32>
    %16 = arith.maximumf %14, %15 : vector<128x128xf32>
    %cst_11 = arith.constant dense<0.000000e+00> : vector<128x128xf32>
    %17 = tpu.matmul %16, %5, %cst_11 {dimension_numbers = #tpu.dot_dimension_numbers<[1], [0], [0], [1], [0, 0, 1, 1], [], []>} : vector<128x128xf32>, vector<128x128xf32>, vector<128x128xf32> -> vector<128x128xf32>
    %18 = vector.broadcast %6 : vector<1x128xf32> to vector<128x128xf32>
    %19 = arith.addf %17, %18 : vector<128x128xf32>
    %c0_12 = arith.constant 0 : index
    %c0_13 = arith.constant 0 : index
    %20 = vector.load %arg3[%c0_12, %c0_13] : memref<128x128xf32, #tpu.memory_space<vmem>>, vector<128x128xf32>
    tpu.vector_store %arg3[%c0_12, %c0_13], %19 {strides = array<i32>} : memref<128x128xf32, #tpu.memory_space<vmem>>, vector<128x128xf32>,
    return
  }
  func.func @transform_0(%arg0: i32) -> (i32, i32) {
    %c0_i32 = arith.constant 0 : i32
    %c0_i32_0 = arith.constant 0 : i32
    return %arg0, %c0_i32 : i32, i32
  }
  func.func @transform_1(%arg0: i32) -> (i32, i32) {
    %c0_i32 = arith.constant 0 : i32
    %c0_i32_0 = arith.constant 0 : i32
    %c0_i32_1 = arith.constant 0 : i32
    return %c0_i32, %c0_i32_0 : i32, i32
  }
  func.func @transform_2(%arg0: i32) -> (i32, i32) {
    %c0_i32 = arith.constant 0 : i32
    %c0_i32_0 = arith.constant 0 : i32
    return %arg0, %c0_i32 : i32, i32
  }
}

</mosaic_0001>

<llo_original>
// kernel: dqn_forward.1
$region0: #{dqn_forward.1}
  #allocation0 [shape = 'u32[]', space=smem, size = 0x4, offset = 0x4, fixed_abs, tag = 'smem constant byte address 0x4 - core index']
  #allocation1 [shape = 'u32[72,128]{1,0:T(1,128)}', space=vmem, size = 0x9000, scoped, tag = 'internal scratch']
  %s0 = inlined_call_operand.vmem [shape: f32[256,128], index: 0, kind: input, shape index: {}]
  %s1 = inlined_call_operand.vmem [shape: f32[408,128], index: 1, kind: input, shape index: {}]
  %s2 = inlined_call_operand.vmem [shape: f32[256,128], index: 2, kind: output, shape index: {}]
  %s3 = sld [smem:[#allocation0]]
  $region41: #{dqn_forward.1} parent=0
    _
  %s5 = ssub.s32 1, %s3
  %s6 = scalar_select 0, %s5, %s3
  loop: start=0, step=1, limit=4
  $region2: #{dqn_forward.1} parent=0 // loop_pre_header
    _
  $region3: #{dqn_forward.1} parent=0 // loop_header
    %s8 = sphi 0, %s12
    %p9 = scmp.ge.s32.totalorder %s8, 4
    %s18 = sphi 0, %s20
    %s21 = sphi 0, %s18
    %s22 = sphi 0, %s21
    %s38 = sphi 0, %s22
    %s42 = sphi 0, %s42
    %s44 = sphi 0, %s42
    %s45 = sphi 0, %s44
    %s59 = sphi 0, %s45
    %s65 = sphi 0, %s67
    %s68 = sphi 0, %s65
    %s69 = sphi 0, %s68
    %s85 = sphi 0, %s69
  $region4: #{dqn_forward.1} parent=0 // loop_header_branch
    %11 = sbr.rel (%p9) target = $region8
  $region5: #{dqn_forward.1} parent=0 // loop_body
    %s13 = ssub.s32 %s8, 1
    %s14 = ssub.s32 %s8, 2
    %s15 = sadd.s32 %s8, 1
    %s16 = ssub.s32 %s8, %s15
    %p17 = scmp.eq.s32.totalorder %s16, 0
    %s19 = sadd.s32 %s18, 1
    %s20 = scalar_select %p17, %s18, %s19
    %p23 = pneg %p17
    %p24 = scmp.eq.s32.totalorder %s8, 1
    %p25 = por %p23, %p24
    %p26 = scmp.ne.s32.totalorder %s18, %s21
    %p27 = scmp.eq.s32.totalorder %s8, 0
    %p28 = por %p26, %p27
    %p29 = scmp.ne.s32.totalorder %s18, %s21
    %p30 = scmp.eq.s32.totalorder %s13, 1
    %p31 = por %p29, %p30
    %p32 = scmp.ne.s32.totalorder %s21, %s22
    %p33 = scmp.eq.s32.totalorder %s13, 0
    %p34 = por %p32, %p33
    %p35 = scmp.ne.s32.totalorder %s21, %s22
    %p36 = scmp.eq.s32.totalorder %s14, 1
    %p37 = por %p35, %p36
    %p39 = scmp.ne.s32.totalorder %s22, %s38
    %p40 = scmp.eq.s32.totalorder %s14, 0
    %p41 = por %p39, %p40
    %s43 = sadd.s32 %s42, 1
    %p46 = scmp.eq.s32.totalorder %s8, 1
    %p47 = scmp.ne.s32.totalorder %s42, %s44
    %p48 = scmp.eq.s32.totalorder %s8, 0
    %p49 = por %p47, %p48
    %p50 = scmp.ne.s32.totalorder %s42, %s44
    %p51 = scmp.eq.s32.totalorder %s13, 1
    %p52 = por %p50, %p51
    %p53 = scmp.ne.s32.totalorder %s44, %s45
    %p54 = scmp.eq.s32.totalorder %s13, 0
    %p55 = por %p53, %p54
    %p56 = scmp.ne.s32.totalorder %s44, %s45
    %p57 = scmp.eq.s32.totalorder %s14, 1
    %p58 = por %p56, %p57
    %p60 = scmp.ne.s32.totalorder %s45, %s59
    %p61 = scmp.eq.s32.totalorder %s14, 0
    %p62 = por %p60, %p61
    %s63 = ssub.s32 %s8, %s15
    %p64 = scmp.eq.s32.totalorder %s63, 0
    %s66 = sadd.s32 %s65, 1
    %s67 = scalar_select %p64, %s65, %s66
    %p70 = pneg %p64
    %p71 = scmp.eq.s32.totalorder %s8, 1
    %p72 = por %p70, %p71
    %p73 = scmp.ne.s32.totalorder %s65, %s68
    %p74 = scmp.eq.s32.totalorder %s8, 0
    %p75 = por %p73, %p74
    %p76 = scmp.ne.s32.totalorder %s65, %s68
    %p77 = scmp.eq.s32.totalorder %s13, 1
    %p78 = por %p76, %p77
    %p79 = scmp.ne.s32.totalorder %s68, %s69
    %p80 = scmp.eq.s32.totalorder %s13, 0
    %p81 = por %p79, %p80
    %p82 = scmp.ne.s32.totalorder %s68, %s69
    %p83 = scmp.eq.s32.totalorder %s14, 1
    %p84 = por %p82, %p83
    %p86 = scmp.ne.s32.totalorder %s69, %s85
    %p87 = scmp.eq.s32.totalorder %s14, 0
    %p88 = por %p86, %p87
    %p89 = scmp.le.s32.totalorder 1, %s8
    %p90 = scmp.lt.s32.totalorder %s8, 3
    %p91 = pnand %p89, %p90
    %p92 = pneg %p91
    // Predicated region
    $region9: #{dqn_forward.1} parent=5 // pred_check
      _
    $region10: #{dqn_forward.1} parent=5 // pred_check_branch
      %94 = sbr.rel (%p91) target = $region12
    $region11: #{dqn_forward.1} parent=5 // pred_region
      %s95 = ssub.s32 %s8, 1
      // Predicated region
      $region13: #{dqn_forward.1} parent=11 // pred_check
        %p96 = pneg %p55
      $region14: #{dqn_forward.1} parent=11 // pred_check_branch
        %98 = sbr.rel (%p96) target = $region16
      $region15: #{dqn_forward.1} parent=11 // pred_region
        _
      $region16: #{dqn_forward.1} parent=11 // pred_fallthru
        _
    $region12: #{dqn_forward.1} parent=5 // pred_fallthru
      _
    %p99 = scmp.lt.s32.totalorder %s8, 2
    // Predicated region
    $region17: #{dqn_forward.1} parent=5 // pred_check
      %p100 = pneg %p99
    $region18: #{dqn_forward.1} parent=5 // pred_check_branch
      %102 = sbr.rel (%p100) target = $region20
    $region19: #{dqn_forward.1} parent=5 // pred_region
      // Predicated region
      $region21: #{dqn_forward.1} parent=19 // pred_check
        %p103 = pneg %p28
      $region22: #{dqn_forward.1} parent=19 // pred_check_branch
        %105 = sbr.rel (%p103) target = $region24
      $region23: #{dqn_forward.1} parent=19 // pred_region
        %s106 = smul.u32 16, %s8
        %p107 = scmp.lt.s32.totalorder %s106, 31
        %s108 = scalar_select %p107, %s106, 31
        %s109 = smul.addr %s108, 8
        %s110 = scalar_lea.vmem %s0, %s109
        %s111 = smul.u32 16, %s8
      $region24: #{dqn_forward.1} parent=19 // pred_fallthru
        _
    $region20: #{dqn_forward.1} parent=5 // pred_fallthru
      _
    %p112 = scmp.le.s32.totalorder 1, %s8
    %p113 = scmp.lt.s32.totalorder %s8, 3
    %p114 = pnand %p112, %p113
    %p115 = pneg %p114
    // Predicated region
    $region25: #{dqn_forward.1} parent=5 // pred_check
      _
    $region26: #{dqn_forward.1} parent=5 // pred_check_branch
      %117 = sbr.rel (%p114) target = $region28
    $region27: #{dqn_forward.1} parent=5 // pred_region
      %s118 = ssub.s32 %s8, 1
      %s119 = smul.u32 16, %s13
      %p120 = scmp.lt.s32.totalorder %s119, 31
      %s121 = scalar_select %p120, %s119, 31
      %s122 = smul.addr %s121, 8
      %s123 = scalar_lea.vmem %s0, %s122
      %p124 = pneg %p34
      %p125 = pneg %p31
      %p126 = pneg %p55
      %p127 = pneg %p52
      %p128 = pneg %p81
      %p129 = pneg %p78
      %s130 = smul.u32 16, %s13
      %p131 = scmp.lt.s32.totalorder %s130, 31
      %s132 = scalar_select %p131, %s130, 31
      %s133 = smul.addr %s132, 8
      %s134 = scalar_lea.vmem %s2, %s133
      %s135 = smul.u32 16, %s13
      %p136 = scmp.lt.s32.totalorder %s135, 31
      %s137 = scalar_select %p136, %s135, 31
      %s138 = smul.addr %s137, 8
      %s139 = scalar_lea.vmem %s0, %s138
      %s140 = smul.u32 16, %s13
      %s141 = smul.u32 16, %s13
      %p142 = scmp.lt.s32.totalorder %s141, 31
      %s143 = scalar_select %p142, %s141, 31
      %s144 = smul.addr %s143, 8
      %s145 = scalar_lea.vmem %s2, %s144
      %s146 = smul.u32 16, %s13
      %v147 = vld [vmem:[%s139] sm:$0xff]
      %v148 = vld [vmem:[%s139 + $0x8] sm:$0xff]
      %v149 = vld [vmem:[%s139 + $0x10] sm:$0xff]
      %v150 = vld [vmem:[%s139 + $0x18] sm:$0xff]
      %v151 = vld [vmem:[%s139 + $0x20] sm:$0xff]
      %v152 = vld [vmem:[%s139 + $0x28] sm:$0xff]
      %v153 = vld [vmem:[%s139 + $0x30] sm:$0xff]
      %v154 = vld [vmem:[%s139 + $0x38] sm:$0xff]
      %v155 = vld [vmem:[%s139 + $0x40] sm:$0xff]
      %v156 = vld [vmem:[%s139 + $0x48] sm:$0xff]
      %v157 = vld [vmem:[%s139 + $0x50] sm:$0xff]
      %v158 = vld [vmem:[%s139 + $0x58] sm:$0xff]
      %v159 = vld [vmem:[%s139 + $0x60] sm:$0xff]
      %v160 = vld [vmem:[%s139 + $0x68] sm:$0xff]
      %v161 = vld [vmem:[%s139 + $0x70] sm:$0xff]
      %v162 = vld [vmem:[%s139 + $0x78] sm:$0xff]
      %v163 = vld [vmem:[%s1] sm:$0xff]
      %v164 = vld [vmem:[%s1 + $0x8] sm:$0xff]
      %v165 = vld [vmem:[%s1 + $0x10] sm:$0xff]
      %v166 = vld [vmem:[%s1 + $0x18] sm:$0xff]
      %v167 = vld [vmem:[%s1 + $0x20] sm:$0xff]
      %v168 = vld [vmem:[%s1 + $0x28] sm:$0xff]
      %v169 = vld [vmem:[%s1 + $0x30] sm:$0xff]
      %v170 = vld [vmem:[%s1 + $0x38] sm:$0xff]
      %v171 = vld [vmem:[%s1 + $0x40] sm:$0xff]
      %v172 = vld [vmem:[%s1 + $0x48] sm:$0xff]
      %v173 = vld [vmem:[%s1 + $0x50] sm:$0xff]
      %v174 = vld [vmem:[%s1 + $0x58] sm:$0xff]
      %v175 = vld [vmem:[%s1 + $0x60] sm:$0xff]
      %v176 = vld [vmem:[%s1 + $0x68] sm:$0xff]
      %v177 = vld [vmem:[%s1 + $0x70] sm:$0xff]
      %v178 = vld [vmem:[%s1 + $0x78] sm:$0xff]
      %v179 = vld [vmem:[%s1 + $0x80] sm:$0x1]
      %v180 = vld [vmem:[%s1 + $0x88] sm:$0xff]
      %v181 = vld [vmem:[%s1 + $0x90] sm:$0xff]
      %v182 = vld [vmem:[%s1 + $0x98] sm:$0xff]
      %v183 = vld [vmem:[%s1 + $0xa0] sm:$0xff]
      %v184 = vld [vmem:[%s1 + $0xa8] sm:$0xff]
      %v185 = vld [vmem:[%s1 + $0xb0] sm:$0xff]
      %v186 = vld [vmem:[%s1 + $0xb8] sm:$0xff]
      %v187 = vld [vmem:[%s1 + $0xc0] sm:$0xff]
      %v188 = vld [vmem:[%s1 + $0xc8] sm:$0xff]
      %v189 = vld [vmem:[%s1 + $0xd0] sm:$0xff]
      %v190 = vld [vmem:[%s1 + $0xd8] sm:$0xff]
      %v191 = vld [vmem:[%s1 + $0xe0] sm:$0xff]
      %v192 = vld [vmem:[%s1 + $0xe8] sm:$0xff]
      %v193 = vld [vmem:[%s1 + $0xf0] sm:$0xff]
      %v194 = vld [vmem:[%s1 + $0xf8] sm:$0xff]
      %v195 = vld [vmem:[%s1 + $0x100] sm:$0xff]
      %v196 = vld [vmem:[%s1 + $0x108] sm:$0x1]
      %v197 = vld [vmem:[%s1 + $0x110] sm:$0xff]
      %v198 = vld [vmem:[%s1 + $0x118] sm:$0xff]
      %v199 = vld [vmem:[%s1 + $0x120] sm:$0xff]
      %v200 = vld [vmem:[%s1 + $0x128] sm:$0xff]
      %v201 = vld [vmem:[%s1 + $0x130] sm:$0xff]
      %v202 = vld [vmem:[%s1 + $0x138] sm:$0xff]
      %v203 = vld [vmem:[%s1 + $0x140] sm:$0xff]
      %v204 = vld [vmem:[%s1 + $0x148] sm:$0xff]
      %v205 = vld [vmem:[%s1 + $0x150] sm:$0xff]
      %v206 = vld [vmem:[%s1 + $0x158] sm:$0xff]
      %v207 = vld [vmem:[%s1 + $0x160] sm:$0xff]
      %v208 = vld [vmem:[%s1 + $0x168] sm:$0xff]
      %v209 = vld [vmem:[%s1 + $0x170] sm:$0xff]
      %v210 = vld [vmem:[%s1 + $0x178] sm:$0xff]
      %v211 = vld [vmem:[%s1 + $0x180] sm:$0xff]
      %v212 = vld [vmem:[%s1 + $0x188] sm:$0xff]
      %v213 = vld [vmem:[%s1 + $0x190] sm:$0x1]
      %v214 = vperm.slane %v179, 0
      %215 = vmatpush.msra.mxu0 %v178
      %216 = vmatpush.msra.mxu0 %v177
      %217 = vmatpush.msra.mxu0 %v176
      %218 = vmatpush.msra.mxu0 %v175
      %219 = vmatpush.msra.mxu0 %v174
      %220 = vmatpush.msra.mxu0 %v173
      %221 = vmatpush.msra.mxu0 %v172
      %222 = vmatpush.msra.mxu0 %v171
      %223 = vmatpush.msra.mxu0 %v170
      %224 = vmatpush.msra.mxu0 %v169
      %225 = vmatpush.msra.mxu0 %v168
      %226 = vmatpush.msra.mxu0 %v167
      %227 = vmatpush.msra.mxu0 %v166
      %228 = vmatpush.msra.mxu0 %v165
      %229 = vmatpush.msra.mxu0 %v164
      %230 = vmatpush.msra.mxu0 %v163
      %231 = vmatmul.f32.gmra.mxu0 %v147
      %v232 = vpop.f32.mrf.mxu0
      %v233 = vadd.f32 %v214, %v232
      %234 = vmatmul.f32.gmra.mxu0 %v148
      %v235 = vpop.f32.mrf.mxu0
      %v236 = vadd.f32 %v214, %v235
      %237 = vmatmul.f32.gmra.mxu0 %v149
      %v238 = vpop.f32.mrf.mxu0
      %v239 = vadd.f32 %v214, %v238
      %240 = vmatmul.f32.gmra.mxu0 %v150
      %v241 = vpop.f32.mrf.mxu0
      %v242 = vadd.f32 %v214, %v241
      %243 = vmatmul.f32.gmra.mxu0 %v151
      %v244 = vpop.f32.mrf.mxu0
      %v245 = vadd.f32 %v214, %v244
      %246 = vmatmul.f32.gmra.mxu0 %v152
      %v247 = vpop.f32.mrf.mxu0
      %v248 = vadd.f32 %v214, %v247
      %249 = vmatmul.f32.gmra.mxu0 %v153
      %v250 = vpop.f32.mrf.mxu0
      %v251 = vadd.f32 %v214, %v250
      %252 = vmatmul.f32.gmra.mxu0 %v154
      %v253 = vpop.f32.mrf.mxu0
      %v254 = vadd.f32 %v214, %v253
      %255 = vmatmul.f32.gmra.mxu0 %v155
      %v256 = vpop.f32.mrf.mxu0
      %v257 = vadd.f32 %v214, %v256
      %258 = vmatmul.f32.gmra.mxu0 %v156
      %v259 = vpop.f32.mrf.mxu0
      %v260 = vadd.f32 %v214, %v259
      %261 = vmatmul.f32.gmra.mxu0 %v157
      %v262 = vpop.f32.mrf.mxu0
      %v263 = vadd.f32 %v214, %v262
      %264 = vmatmul.f32.gmra.mxu0 %v158
      %v265 = vpop.f32.mrf.mxu0
      %v266 = vadd.f32 %v214, %v265
      %267 = vmatmul.f32.gmra.mxu0 %v159
      %v268 = vpop.f32.mrf.mxu0
      %v269 = vadd.f32 %v214, %v268
      %270 = vmatmul.f32.gmra.mxu0 %v160
      %v271 = vpop.f32.mrf.mxu0
      %v272 = vadd.f32 %v214, %v271
      %273 = vmatmul.f32.gmra.mxu0 %v161
      %v274 = vpop.f32.mrf.mxu0
      %v275 = vadd.f32 %v214, %v274
      %276 = vmatmul.f32.gmra.mxu0 %v162
      %v277 = vpop.f32.mrf.mxu0
      %v278 = vadd.f32 %v214, %v277
      %279 = vdwg.mxu0
      %v280 = vmax.f32 %v233, 0.0
      %v281 = vmax.f32 %v236, 0.0
      %v282 = vmax.f32 %v239, 0.0
      %v283 = vmax.f32 %v242, 0.0
      %v284 = vmax.f32 %v245, 0.0
      %v285 = vmax.f32 %v248, 0.0
      %v286 = vmax.f32 %v251, 0.0
      %v287 = vmax.f32 %v254, 0.0
      %v288 = vmax.f32 %v257, 0.0
      %v289 = vmax.f32 %v260, 0.0
      %v290 = vmax.f32 %v263, 0.0
      %v291 = vmax.f32 %v266, 0.0
      %v292 = vmax.f32 %v269, 0.0
      %v293 = vmax.f32 %v272, 0.0
      %v294 = vmax.f32 %v275, 0.0
      %v295 = vmax.f32 %v278, 0.0
      %v296 = vperm.slane %v196, 0
      %297 = vmatpush.msra.mxu0 %v195
      %298 = vmatpush.msra.mxu0 %v194
      %299 = vmatpush.msra.mxu0 %v193
      %300 = vmatpush.msra.mxu0 %v192
      %301 = vmatpush.msra.mxu0 %v191
      %302 = vmatpush.msra.mxu0 %v190
      %303 = vmatpush.msra.mxu0 %v189
      %304 = vmatpush.msra.mxu0 %v188
      %305 = vmatpush.msra.mxu0 %v187
      %306 = vmatpush.msra.mxu0 %v186
      %307 = vmatpush.msra.mxu0 %v185
      %308 = vmatpush.msra.mxu0 %v184
      %309 = vmatpush.msra.mxu0 %v183
      %310 = vmatpush.msra.mxu0 %v182
      %311 = vmatpush.msra.mxu0 %v181
      %312 = vmatpush.msra.mxu0 %v180
      %313 = vmatmul.f32.gmra.mxu0 %v280
      %v314 = vpop.f32.mrf.mxu0
      %v315 = vadd.f32 %v296, %v314
      %316 = vmatmul.f32.gmra.mxu0 %v281
      %v317 = vpop.f32.mrf.mxu0
      %v318 = vadd.f32 %v296, %v317
      %319 = vmatmul.f32.gmra.mxu0 %v282
      %v320 = vpop.f32.mrf.mxu0
      %v321 = vadd.f32 %v296, %v320
      %322 = vmatmul.f32.gmra.mxu0 %v283
      %v323 = vpop.f32.mrf.mxu0
      %v324 = vadd.f32 %v296, %v323
      %325 = vmatmul.f32.gmra.mxu0 %v284
      %v326 = vpop.f32.mrf.mxu0
      %v327 = vadd.f32 %v296, %v326
      %328 = vmatmul.f32.gmra.mxu0 %v285
      %v329 = vpop.f32.mrf.mxu0
      %v330 = vadd.f32 %v296, %v329
      %331 = vmatmul.f32.gmra.mxu0 %v286
      %v332 = vpop.f32.mrf.mxu0
      %v333 = vadd.f32 %v296, %v332
      %334 = vmatmul.f32.gmra.mxu0 %v287
      %v335 = vpop.f32.mrf.mxu0
      %v336 = vadd.f32 %v296, %v335
      %337 = vmatmul.f32.gmra.mxu0 %v288
      %v338 = vpop.f32.mrf.mxu0
      %v339 = vadd.f32 %v296, %v338
      %340 = vmatmul.f32.gmra.mxu0 %v289
      %v341 = vpop.f32.mrf.mxu0
      %v342 = vadd.f32 %v296, %v341
      %343 = vmatmul.f32.gmra.mxu0 %v290
      %v344 = vpop.f32.mrf.mxu0
      %v345 = vadd.f32 %v296, %v344
      %346 = vmatmul.f32.gmra.mxu0 %v291
      %v347 = vpop.f32.mrf.mxu0
      %v348 = vadd.f32 %v296, %v347
      %349 = vmatmul.f32.gmra.mxu0 %v292
      %v350 = vpop.f32.mrf.mxu0
      %v351 = vadd.f32 %v296, %v350
      %352 = vmatmul.f32.gmra.mxu0 %v293
      %v353 = vpop.f32.mrf.mxu0
      %v354 = vadd.f32 %v296, %v353
      %355 = vmatmul.f32.gmra.mxu0 %v294
      %v356 = vpop.f32.mrf.mxu0
      %v357 = vadd.f32 %v296, %v356
      %358 = vmatmul.f32.gmra.mxu0 %v295
      %v359 = vpop.f32.mrf.mxu0
      %v360 = vadd.f32 %v296, %v359
      %361 = vdwg.mxu0
      %v362 = vmax.f32 %v315, 0.0
      %v363 = vmax.f32 %v318, 0.0
      %v364 = vmax.f32 %v321, 0.0
      %v365 = vmax.f32 %v324, 0.0
      %v366 = vmax.f32 %v327, 0.0
      %v367 = vmax.f32 %v330, 0.0
      %v368 = vmax.f32 %v333, 0.0
      %v369 = vmax.f32 %v336, 0.0
      %v370 = vmax.f32 %v339, 0.0
      %v371 = vmax.f32 %v342, 0.0
      %v372 = vmax.f32 %v345, 0.0
      %v373 = vmax.f32 %v348, 0.0
      %v374 = vmax.f32 %v351, 0.0
      %v375 = vmax.f32 %v354, 0.0
      %v376 = vmax.f32 %v357, 0.0
      %v377 = vmax.f32 %v360, 0.0
      %v378 = vperm.slane %v213, 0
      %379 = vmatpush.msra.mxu0 %v212
      %380 = vmatpush.msra.mxu0 %v211
      %381 = vmatpush.msra.mxu0 %v210
      %382 = vmatpush.msra.mxu0 %v209
      %383 = vmatpush.msra.mxu0 %v208
      %384 = vmatpush.msra.mxu0 %v207
      %385 = vmatpush.msra.mxu0 %v206
      %386 = vmatpush.msra.mxu0 %v205
      %387 = vmatpush.msra.mxu0 %v204
      %388 = vmatpush.msra.mxu0 %v203
      %389 = vmatpush.msra.mxu0 %v202
      %390 = vmatpush.msra.mxu0 %v201
      %391 = vmatpush.msra.mxu0 %v200
      %392 = vmatpush.msra.mxu0 %v199
      %393 = vmatpush.msra.mxu0 %v198
      %394 = vmatpush.msra.mxu0 %v197
      %395 = vmatmul.f32.gmra.mxu0 %v362
      %v396 = vpop.f32.mrf.mxu0
      %v397 = vadd.f32 %v378, %v396
      %398 = vmatmul.f32.gmra.mxu0 %v363
      %v399 = vpop.f32.mrf.mxu0
      %v400 = vadd.f32 %v378, %v399
      %401 = vmatmul.f32.gmra.mxu0 %v364
      %v402 = vpop.f32.mrf.mxu0
      %v403 = vadd.f32 %v378, %v402
      %404 = vmatmul.f32.gmra.mxu0 %v365
      %v405 = vpop.f32.mrf.mxu0
      %v406 = vadd.f32 %v378, %v405
      %407 = vmatmul.f32.gmra.mxu0 %v366
      %v408 = vpop.f32.mrf.mxu0
      %v409 = vadd.f32 %v378, %v408
      %410 = vmatmul.f32.gmra.mxu0 %v367
      %v411 = vpop.f32.mrf.mxu0
      %v412 = vadd.f32 %v378, %v411
      %413 = vmatmul.f32.gmra.mxu0 %v368
      %v414 = vpop.f32.mrf.mxu0
      %v415 = vadd.f32 %v378, %v414
      %416 = vmatmul.f32.gmra.mxu0 %v369
      %v417 = vpop.f32.mrf.mxu0
      %v418 = vadd.f32 %v378, %v417
      %419 = vmatmul.f32.gmra.mxu0 %v370
      %v420 = vpop.f32.mrf.mxu0
      %v421 = vadd.f32 %v378, %v420
      %422 = vmatmul.f32.gmra.mxu0 %v371
      %v423 = vpop.f32.mrf.mxu0
      %v424 = vadd.f32 %v378, %v423
      %425 = vmatmul.f32.gmra.mxu0 %v372
      %v426 = vpop.f32.mrf.mxu0
      %v427 = vadd.f32 %v378, %v426
      %428 = vmatmul.f32.gmra.mxu0 %v373
      %v429 = vpop.f32.mrf.mxu0
      %v430 = vadd.f32 %v378, %v429
      %431 = vmatmul.f32.gmra.mxu0 %v374
      %v432 = vpop.f32.mrf.mxu0
      %v433 = vadd.f32 %v378, %v432
      %434 = vmatmul.f32.gmra.mxu0 %v375
      %v435 = vpop.f32.mrf.mxu0
      %v436 = vadd.f32 %v378, %v435
      %437 = vmatmul.f32.gmra.mxu0 %v376
      %v438 = vpop.f32.mrf.mxu0
      %v439 = vadd.f32 %v378, %v438
      %440 = vmatmul.f32.gmra.mxu0 %v377
      %v441 = vpop.f32.mrf.mxu0
      %v442 = vadd.f32 %v378, %v441
      %443 = vdwg.mxu0
      %444 = vst [vmem:[%s145] sm:$0xff] %v397
      %445 = vst [vmem:[%s145 + $0x8] sm:$0xff] %v400
      %446 = vst [vmem:[%s145 + $0x10] sm:$0xff] %v403
      %447 = vst [vmem:[%s145 + $0x18] sm:$0xff] %v406
      %448 = vst [vmem:[%s145 + $0x20] sm:$0xff] %v409
      %449 = vst [vmem:[%s145 + $0x28] sm:$0xff] %v412
      %450 = vst [vmem:[%s145 + $0x30] sm:$0xff] %v415
      %451 = vst [vmem:[%s145 + $0x38] sm:$0xff] %v418
      %452 = vst [vmem:[%s145 + $0x40] sm:$0xff] %v421
      %453 = vst [vmem:[%s145 + $0x48] sm:$0xff] %v424
      %454 = vst [vmem:[%s145 + $0x50] sm:$0xff] %v427
      %455 = vst [vmem:[%s145 + $0x58] sm:$0xff] %v430
      %456 = vst [vmem:[%s145 + $0x60] sm:$0xff] %v433
      %457 = vst [vmem:[%s145 + $0x68] sm:$0xff] %v436
      %458 = vst [vmem:[%s145 + $0x70] sm:$0xff] %v439
      %459 = vst [vmem:[%s145 + $0x78] sm:$0xff] %v442
      %s460 = smul.u32 16, %s13
      %p461 = scmp.lt.s32.totalorder %s460, 31
      %s462 = scalar_select %p461, %s460, 31
      %s463 = smul.addr %s462, 8
      %s464 = scalar_lea.vmem %s2, %s463
      // Predicated region
      $region29: #{dqn_forward.1} parent=27 // pred_check
        %p465 = pneg %p78
      $region30: #{dqn_forward.1} parent=27 // pred_check_branch
        %467 = sbr.rel (%p465) target = $region32
      $region31: #{dqn_forward.1} parent=27 // pred_region
        %s468 = smul.u32 16, %s13
      $region32: #{dqn_forward.1} parent=27 // pred_fallthru
        _
    $region28: #{dqn_forward.1} parent=5 // pred_fallthru
      _
    %p469 = scmp.le.s32.totalorder 2, %s8
    // Predicated region
    $region33: #{dqn_forward.1} parent=5 // pred_check
      %p470 = pneg %p469
    $region34: #{dqn_forward.1} parent=5 // pred_check_branch
      %472 = sbr.rel (%p470) target = $region36
    $region35: #{dqn_forward.1} parent=5 // pred_region
      %s473 = ssub.s32 %s8, 2
      // Predicated region
      $region37: #{dqn_forward.1} parent=35 // pred_check
        %p474 = pneg %p84
      $region38: #{dqn_forward.1} parent=35 // pred_check_branch
        %476 = sbr.rel (%p474) target = $region40
      $region39: #{dqn_forward.1} parent=35 // pred_region
        %s477 = smul.u32 16, %s14
        %p478 = scmp.lt.s32.totalorder %s477, 31
        %s479 = scalar_select %p478, %s477, 31
        %s480 = smul.addr %s479, 8
        %s481 = scalar_lea.vmem %s2, %s480
      $region40: #{dqn_forward.1} parent=35 // pred_fallthru
        _
    $region36: #{dqn_forward.1} parent=5 // pred_fallthru
      _
  $region6: #{dqn_forward.1} parent=0 // loop_footer
    %s12 = sadd.s32 1, %s8
  $region7: #{dqn_forward.1} parent=0 // loop_footer_branch
    %7 = sbr.rel target = $region3
  $region8: #{dqn_forward.1} parent=0 // loop_exit
    _

</llo_original>
